<compile_context>
chip_gen: v5e
topology: v5e:2x2
jax: 0.10.0
libtpu: 0.0.40
codegen_flags: <defaults>
</compile_context>

<pallas_src>
import jax
import jax.numpy as jnp
from jax.experimental import pallas as pl
from jax.experimental.pallas import tpu as pltpu


_VMEM_LIMIT = 64 * 1024 * 1024   # raise scoped VMEM limit (v5e default: 16 MiB)


# ---------------------------------------------------------------------------
# Tile-size helpers
# ---------------------------------------------------------------------------
def _pick_tile_p(p, bytes_per_lane, budget_bytes):
    """Largest lane-dense tile (multiple of 128, <= p) whose pipelined VMEM
    footprint stays under budget. Prefers exact divisors of p; otherwise the
    grid uses pl.cdiv and the edge block is masked on store."""
    cands = [t for t in (2048, 1024, 512, 256, 128)
             if t <= p and t * bytes_per_lane <= budget_bytes]
    if not cands:
        return p                      # tiny / odd spatial extent: one full block
    for t in cands:
        if p % t == 0:
            return t
    return cands[0]


def _pick_tile_r(n):
    """Sublane-dense row tile (multiple of 8) for the flattened (B*C, P) view."""
    for t in (512, 256, 128, 64, 32, 16, 8):
        if n % t == 0:
            return t
    return n                          # full extent is always a legal block size


def _split_one_step_grid(tile_p, grid_r, grid_p, p):
    """v7x has 2 TensorCores: keep >= 2 parallel grid steps when possible."""
    if grid_r * grid_p == 1 and tile_p % 256 == 0:
        tile_p //= 2
        grid_p = pl.cdiv(p, tile_p)
    return tile_p, grid_p


# ---------------------------------------------------------------------------
# Kernels
# ---------------------------------------------------------------------------
def _gate_mul_kernel(x_ref, gate_ref, out_ref):
    """out = x * gate (gate broadcast along lanes).
    x_ref/out_ref: (TR, TP) native dtype; gate_ref: (TR, 1) f32."""
    x = x_ref[...].astype(jnp.float32)
    out_ref[...] = (x * gate_ref[...]).astype(out_ref.dtype)


def _se_fused_kernel(x_ref, xse_ref, w1_ref, b1_ref, w2_ref, b2_ref, out_ref):
    """Fully fused SE for full-spatial x_se.
    x_ref/out_ref: (C, TP); xse_ref: (C_in, TP);
    w1: (C_mid, C_in); b1: (C_mid, 1); w2: (C_out, C_mid); b2: (C_out, 1)."""
    xse = xse_ref[...].astype(jnp.float32)
    w1, b1 = w1_ref[...], b1_ref[...]
    w2, b2 = w2_ref[...], b2_ref[...]
    c_mid, c_in = w1.shape
    c_out = w2.shape[0]
    tp = xse.shape[-1]

    def conv1x1(w, b, v, n_in, n_out):
        # 1x1 conv == channel matmul. For tiny channel counts the MXU tile is
        # nearly empty, so unroll as broadcast-FMA VPU ops instead.
        if n_in >= 64:
            return jnp.dot(w, v, preferred_element_type=jnp.float32) + b
        acc = jnp.broadcast_to(b, (n_out, tp))
        for c in range(n_in):
            acc = acc + w[:, c:c + 1] * v[c:c + 1, :]
        return acc

    h = jnp.maximum(conv1x1(w1, b1, xse, c_in, c_mid), 0.0)
    g = conv1x1(w2, b2, h, c_mid, c_out)
    # sigmoid: exp and approx reciprocal both run on the EUP slot (VALU stays free)
    gate = pl.reciprocal(1.0 + jnp.exp(-g), approx=True)
    out_ref[...] = (x_ref[...].astype(jnp.float32) * gate).astype(out_ref.dtype)


# ---------------------------------------------------------------------------
# Wrappers
# ---------------------------------------------------------------------------
def _se_pooled(x, x_se_vec, w1, b1, w2, b2):
    """Classic SE: x_se is a (B, C_in) squeeze vector. The gate is O(B*C^2)
    and computed once in plain JAX (per perf review); the Pallas kernel is a
    pure lane/sublane-dense broadcast multiply over the (B*C, H*W) view."""
    B, C, H, W = x.shape
    P = H * W
    h = jnp.maximum(x_se_vec.astype(jnp.float32) @ w1.T + b1, 0.0)
    gate = jax.nn.sigmoid(h @ w2.T + b2)           # (B, C) f32
    BC = B * C
    xf = x.reshape(BC, P)
    gf = gate.reshape(BC, 1)

    tile_r = _pick_tile_r(BC)
    itemsize = x.dtype.itemsize
    # per lane: x + out streams (double-buffered, native dtype) + f32 temp
    tile_p = _pick_tile_p(P, bytes_per_lane=tile_r * (4 * itemsize + 4),
                          budget_bytes=16 * 1024 * 1024)
    grid_r, grid_p = pl.cdiv(BC, tile_r), pl.cdiv(P, tile_p)
    tile_p, grid_p = _split_one_step_grid(tile_p, grid_r, grid_p, P)

    out = pl.pallas_call(
        _gate_mul_kernel,
        out_shape=jax.ShapeDtypeStruct((BC, P), x.dtype),
        grid=(grid_r, grid_p),
        in_specs=[
            pl.BlockSpec((tile_r, tile_p), lambda r, p: (r, p)),   # x tile
            pl.BlockSpec((tile_r, 1), lambda r, p: (r, 0)),        # gate column
        ],
        out_specs=pl.BlockSpec((tile_r, tile_p), lambda r, p: (r, p)),
        compiler_params=pltpu.CompilerParams(
            dimension_semantics=("parallel", "parallel"),
            vmem_limit_bytes=_VMEM_LIMIT),
    )(xf, gf)
    return out.reshape(B, C, H, W)


def _se_fused(x, x_se, w1, b1, w2, b2):
    """General case: x_se has the full (H, W) spatial extent, so fuse the 1x1
    convs, sigmoid and the multiply into one lane-dense pass over the map."""
    B, C, H, W = x.shape
    c_mid, c_in = w1.shape
    c_out = w2.shape[0]
    assert c_out == C, "x * gate requires conv_expand out-channels == C"
    P = H * W
    xf = x.reshape(B, C, P)
    xsef = x_se.reshape(B, c_in, P)

    itemsize = x.dtype.itemsize
    # Resident weight/bias blocks are still double-buffered by the pipeline even
    # with a constant index_map; account for them in the VMEM budget.
    # NOTE: pipeline_mode=pl.Buffered(1) would halve that; left default for portability.
    weight_bytes = 4 * 4 * (c_mid * c_in + c_out * c_mid + c_mid + c_out)
    budget = max(4 * 1024 * 1024, 20 * 1024 * 1024 - weight_bytes)
    # per lane: x/out + x_se streams (double-buffered, native) + f32 temps
    bytes_per_lane = (2 * C + c_in) * 2 * itemsize + 4 * max(C, c_in, c_mid)
    tile_p = _pick_tile_p(P, bytes_per_lane=bytes_per_lane, budget_bytes=budget)
    grid_p = pl.cdiv(P, tile_p)
    tile_p, grid_p = _split_one_step_grid(tile_p, B, grid_p, P)

    out = pl.pallas_call(
        _se_fused_kernel,
        out_shape=jax.ShapeDtypeStruct((B, C, P), x.dtype),
        grid=(B, grid_p),
        in_specs=[
            pl.BlockSpec((None, C, tile_p), lambda b, p: (b, 0, p)),     # x
            pl.BlockSpec((None, c_in, tile_p), lambda b, p: (b, 0, p)),  # x_se
            pl.BlockSpec((c_mid, c_in), lambda b, p: (0, 0)),            # w_reduce (resident)
            pl.BlockSpec((c_mid, 1), lambda b, p: (0, 0)),               # b_reduce (resident)
            pl.BlockSpec((c_out, c_mid), lambda b, p: (0, 0)),           # w_expand (resident)
            pl.BlockSpec((c_out, 1), lambda b, p: (0, 0)),               # b_expand (resident)
        ],
        out_specs=pl.BlockSpec((None, C, tile_p), lambda b, p: (b, 0, p)),
        compiler_params=pltpu.CompilerParams(
            dimension_semantics=("parallel", "parallel"),
            vmem_limit_bytes=_VMEM_LIMIT),
    )(xf, xsef, w1, b1.reshape(c_mid, 1), w2, b2.reshape(c_out, 1))
    return out.reshape(B, C, H, W)


def se_layer(x, x_se, w_reduce, b_reduce, w_expand, b_expand):
    """SELayer.forward.
    x: (B, C, H, W); x_se: (B, C_in, H, W) or (B, C_in, 1, 1);
    w_reduce: (C_mid, C_in, 1, 1); b_reduce: (C_mid,);
    w_expand: (C, C_mid, 1, 1);    b_expand: (C,). Returns (B, C, H, W), x.dtype."""
    B, C, H, W = x.shape
    w1 = w_reduce.reshape(w_reduce.shape[0], w_reduce.shape[1]).astype(jnp.float32)
    w2 = w_expand.reshape(w_expand.shape[0], w_expand.shape[1]).astype(jnp.float32)
    b1 = b_reduce.astype(jnp.float32)
    b2 = b_expand.astype(jnp.float32)

    if x_se.shape[2:] == (1, 1):
        # Classic SE: do NOT broadcast x_se to (B, C, H, W) — saves two full HBM streams.
        return _se_pooled(x, x_se.reshape(B, -1), w1, b1, w2, b2)
    if x_se.shape[2:] != (H, W):
        # TODO(synk): rare partial-broadcast shapes; materialize then use the fused path.
        x_se = jnp.broadcast_to(x_se, x_se.shape[:2] + (H, W))
    return _se_fused(x, x_se, w1, b1, w2, b2)


# ---------------------------------------------------------------------------
# Pure-JAX reference (mirrors the PyTorch module)
# ---------------------------------------------------------------------------
def _reference(x, x_se, w_reduce, b_reduce, w_expand, b_expand):
    w1 = w_reduce.reshape(w_reduce.shape[0], w_reduce.shape[1])
    w2 = w_expand.reshape(w_expand.shape[0], w_expand.shape[1])
    h = jnp.einsum('oc,bchw->bohw', w1, x_se) + b_reduce[None, :, None, None]
    h = jnp.maximum(h, 0.0)
    g = jnp.einsum('oc,bchw->bohw', w2, h) + b_expand[None, :, None, None]
    return x * jax.nn.sigmoid(g)


if __name__ == "__main__":
    # SELayer(channels=4) on a (2, 4, 16, 16) feature map.
    B, C, H, W = 2, 4, 16, 16

    key = jax.random.PRNGKey(0)
    k1, k2, k3, k4, k5, k6, k7 = jax.random.split(key, 7)

    # PyTorch Conv2d(C, C, 1) default init: U(-1/sqrt(C), 1/sqrt(C)).
    bound = 1.0 / (C ** 0.5)
    w_reduce = jax.random.uniform(k1, (C, C, 1, 1), jnp.float32, -bound, bound)
    b_reduce = jax.random.uniform(k2, (C,), jnp.float32, -bound, bound)
    w_expand = jax.random.uniform(k3, (C, C, 1, 1), jnp.float32, -bound, bound)
    b_expand = jax.random.uniform(k4, (C,), jnp.float32, -bound, bound)

    x = jax.random.normal(k5, (B, C, H, W), jnp.float32)
    x_se_full = jax.random.normal(k6, (B, C, H, W), jnp.float32)   # same-shape x_se
    x_se_pool = jax.random.normal(k7, (B, C, 1, 1), jnp.float32)   # classic SE squeeze

    # Path B: fully fused kernel (x_se has full spatial extent).
    out_full = jax.block_until_ready(
        se_layer(x, x_se_full, w_reduce, b_reduce, w_expand, b_expand))
    ref_full = _reference(x, x_se_full, w_reduce, b_reduce, w_expand, b_expand)
    assert out_full.shape == (B, C, H, W)
    # Tolerance covers approx-reciprocal sigmoid and any bf16-pass f32 matmuls.
    assert jnp.allclose(out_full, ref_full, atol=2e-2, rtol=2e-2), \
        float(jnp.max(jnp.abs(out_full - ref_full)))

    # Path A: precomputed gate + lane/sublane-dense broadcast multiply.
    out_pool = jax.block_until_ready(
        se_layer(x, x_se_pool, w_reduce, b_reduce, w_expand, b_expand))
    ref_pool = _reference(x, x_se_pool, w_reduce, b_reduce, w_expand, b_expand)
    assert out_pool.shape == (B, C, H, W)
    assert jnp.allclose(out_pool, ref_pool, atol=2e-2, rtol=2e-2), \
        float(jnp.max(jnp.abs(out_pool - ref_pool)))

    print("KERNEL_OK")
</pallas_src>

<mosaic_0001>
module attributes {stable_mosaic.version = 11 : i64} {
  func.func @_se_fused_kernel(%arg0: i32, %arg1: i32, %arg2: memref<1x4x256xf32, #tpu.memory_space<vmem>>, %arg3: memref<1x4x256xf32, #tpu.memory_space<vmem>>, %arg4: memref<4x4xf32, #tpu.memory_space<vmem>>, %arg5: memref<4x1xf32, #tpu.memory_space<vmem>>, %arg6: memref<4x4xf32, #tpu.memory_space<vmem>>, %arg7: memref<4x1xf32, #tpu.memory_space<vmem>>, %arg8: memref<1x4x256xf32, #tpu.memory_space<vmem>>) attributes {dimension_semantics = [#tpu.dimension_semantics<parallel>, #tpu.dimension_semantics<parallel>], iteration_bounds = array<i64: 2, 1>, scalar_prefetch = 0 : i64, scratch_operands = 0 : i64, tpu.core_type = #tpu.core_type<tc>, window_params = [{transform_indices = @transform_0, window_bounds = array<i64: 1, 4, 256>}, {transform_indices = @transform_1, window_bounds = array<i64: 1, 4, 256>}, {pipeline_mode = #tpu.pipeline_mode<synchronous>, transform_indices = @transform_2, window_bounds = array<i64: 4, 4>}, {pipeline_mode = #tpu.pipeline_mode<synchronous>, transform_indices = @transform_3, window_bounds = array<i64: 4, 1>}, {pipeline_mode = #tpu.pipeline_mode<synchronous>, transform_indices = @transform_4, window_bounds = array<i64: 4, 4>}, {pipeline_mode = #tpu.pipeline_mode<synchronous>, transform_indices = @transform_5, window_bounds = array<i64: 4, 1>}, {transform_indices = @transform_6, window_bounds = array<i64: 1, 4, 256>}]} {
    %c0 = arith.constant 0 : index
    %c0_0 = arith.constant 0 : index
    %c0_1 = arith.constant 0 : index
    %0 = vector.load %arg3[%c0, %c0_0, %c0_1] : memref<1x4x256xf32, #tpu.memory_space<vmem>>, vector<1x4x256xf32>
    %1 = vector.shape_cast %0 : vector<1x4x256xf32> to vector<4x256xf32>
    %c0_2 = arith.constant 0 : index
    %c0_3 = arith.constant 0 : index
    %2 = vector.load %arg4[%c0_2, %c0_3] : memref<4x4xf32, #tpu.memory_space<vmem>>, vector<4x4xf32>
    %c0_4 = arith.constant 0 : index
    %c0_5 = arith.constant 0 : index
    %3 = vector.load %arg5[%c0_4, %c0_5] : memref<4x1xf32, #tpu.memory_space<vmem>>, vector<4x1xf32>
    %c0_6 = arith.constant 0 : index
    %c0_7 = arith.constant 0 : index
    %4 = vector.load %arg6[%c0_6, %c0_7] : memref<4x4xf32, #tpu.memory_space<vmem>>, vector<4x4xf32>
    %c0_8 = arith.constant 0 : index
    %c0_9 = arith.constant 0 : index
    %5 = vector.load %arg7[%c0_8, %c0_9] : memref<4x1xf32, #tpu.memory_space<vmem>>, vector<4x1xf32>
    %6 = vector.shape_cast %3 : vector<4x1xf32> to vector<4x1xf32>
    %7 = vector.broadcast %6 : vector<4x1xf32> to vector<4x256xf32>
    %8 = vector.extract_strided_slice %2 {offsets = [0, 0], sizes = [4, 1], strides = [1, 1]} : vector<4x4xf32> to vector<4x1xf32>
    %9 = vector.extract_strided_slice %1 {offsets = [0, 0], sizes = [1, 256], strides = [1, 1]} : vector<4x256xf32> to vector<1x256xf32>
    %10 = vector.broadcast %8 : vector<4x1xf32> to vector<4x256xf32>
    %11 = vector.broadcast %9 : vector<1x256xf32> to vector<4x256xf32>
    %12 = arith.mulf %10, %11 : vector<4x256xf32>
    %13 = arith.addf %7, %12 : vector<4x256xf32>
    %14 = vector.extract_strided_slice %2 {offsets = [0, 1], sizes = [4, 1], strides = [1, 1]} : vector<4x4xf32> to vector<4x1xf32>
    %15 = vector.extract_strided_slice %1 {offsets = [1, 0], sizes = [1, 256], strides = [1, 1]} : vector<4x256xf32> to vector<1x256xf32>
    %16 = vector.broadcast %14 : vector<4x1xf32> to vector<4x256xf32>
    %17 = vector.broadcast %15 : vector<1x256xf32> to vector<4x256xf32>
    %18 = arith.mulf %16, %17 : vector<4x256xf32>
    %19 = arith.addf %13, %18 : vector<4x256xf32>
    %20 = vector.extract_strided_slice %2 {offsets = [0, 2], sizes = [4, 1], strides = [1, 1]} : vector<4x4xf32> to vector<4x1xf32>
    %21 = vector.extract_strided_slice %1 {offsets = [2, 0], sizes = [1, 256], strides = [1, 1]} : vector<4x256xf32> to vector<1x256xf32>
    %22 = vector.broadcast %20 : vector<4x1xf32> to vector<4x256xf32>
    %23 = vector.broadcast %21 : vector<1x256xf32> to vector<4x256xf32>
    %24 = arith.mulf %22, %23 : vector<4x256xf32>
    %25 = arith.addf %19, %24 : vector<4x256xf32>
    %26 = vector.extract_strided_slice %2 {offsets = [0, 3], sizes = [4, 1], strides = [1, 1]} : vector<4x4xf32> to vector<4x1xf32>
    %27 = vector.extract_strided_slice %1 {offsets = [3, 0], sizes = [1, 256], strides = [1, 1]} : vector<4x256xf32> to vector<1x256xf32>
    %28 = vector.broadcast %26 : vector<4x1xf32> to vector<4x256xf32>
    %29 = vector.broadcast %27 : vector<1x256xf32> to vector<4x256xf32>
    %30 = arith.mulf %28, %29 : vector<4x256xf32>
    %31 = arith.addf %25, %30 : vector<4x256xf32>
    %cst = arith.constant 0.000000e+00 : f32
    %32 = vector.broadcast %cst : f32 to vector<4x256xf32>
    %33 = arith.maximumf %31, %32 : vector<4x256xf32>
    %34 = vector.shape_cast %5 : vector<4x1xf32> to vector<4x1xf32>
    %35 = vector.broadcast %34 : vector<4x1xf32> to vector<4x256xf32>
    %36 = vector.extract_strided_slice %4 {offsets = [0, 0], sizes = [4, 1], strides = [1, 1]} : vector<4x4xf32> to vector<4x1xf32>
    %37 = vector.extract_strided_slice %33 {offsets = [0, 0], sizes = [1, 256], strides = [1, 1]} : vector<4x256xf32> to vector<1x256xf32>
    %38 = vector.broadcast %36 : vector<4x1xf32> to vector<4x256xf32>
    %39 = vector.broadcast %37 : vector<1x256xf32> to vector<4x256xf32>
    %40 = arith.mulf %38, %39 : vector<4x256xf32>
    %41 = arith.addf %35, %40 : vector<4x256xf32>
    %42 = vector.extract_strided_slice %4 {offsets = [0, 1], sizes = [4, 1], strides = [1, 1]} : vector<4x4xf32> to vector<4x1xf32>
    %43 = vector.extract_strided_slice %33 {offsets = [1, 0], sizes = [1, 256], strides = [1, 1]} : vector<4x256xf32> to vector<1x256xf32>
    %44 = vector.broadcast %42 : vector<4x1xf32> to vector<4x256xf32>
    %45 = vector.broadcast %43 : vector<1x256xf32> to vector<4x256xf32>
    %46 = arith.mulf %44, %45 : vector<4x256xf32>
    %47 = arith.addf %41, %46 : vector<4x256xf32>
    %48 = vector.extract_strided_slice %4 {offsets = [0, 2], sizes = [4, 1], strides = [1, 1]} : vector<4x4xf32> to vector<4x1xf32>
    %49 = vector.extract_strided_slice %33 {offsets = [2, 0], sizes = [1, 256], strides = [1, 1]} : vector<4x256xf32> to vector<1x256xf32>
    %50 = vector.broadcast %48 : vector<4x1xf32> to vector<4x256xf32>
    %51 = vector.broadcast %49 : vector<1x256xf32> to vector<4x256xf32>
    %52 = arith.mulf %50, %51 : vector<4x256xf32>
    %53 = arith.addf %47, %52 : vector<4x256xf32>
    %54 = vector.extract_strided_slice %4 {offsets = [0, 3], sizes = [4, 1], strides = [1, 1]} : vector<4x4xf32> to vector<4x1xf32>
    %55 = vector.extract_strided_slice %33 {offsets = [3, 0], sizes = [1, 256], strides = [1, 1]} : vector<4x256xf32> to vector<1x256xf32>
    %56 = vector.broadcast %54 : vector<4x1xf32> to vector<4x256xf32>
    %57 = vector.broadcast %55 : vector<1x256xf32> to vector<4x256xf32>
    %58 = arith.mulf %56, %57 : vector<4x256xf32>
    %59 = arith.addf %53, %58 : vector<4x256xf32>
    %cst_10 = arith.constant 0.000000e+00 : f32
    %60 = vector.broadcast %cst_10 : f32 to vector<4x256xf32>
    %61 = arith.subf %60, %59 : vector<4x256xf32>
    %62 = math.exp %61 : vector<4x256xf32>
    %cst_11 = arith.constant 1.000000e+00 : f32
    %63 = vector.broadcast %cst_11 : f32 to vector<4x256xf32>
    %64 = arith.addf %63, %62 : vector<4x256xf32>
    %65 = tpu.reciprocal %64 {approx = true} : vector<4x256xf32> -> vector<4x256xf32>
    %c0_12 = arith.constant 0 : index
    %c0_13 = arith.constant 0 : index
    %c0_14 = arith.constant 0 : index
    %66 = vector.load %arg2[%c0_12, %c0_13, %c0_14] : memref<1x4x256xf32, #tpu.memory_space<vmem>>, vector<1x4x256xf32>
    %67 = vector.shape_cast %66 : vector<1x4x256xf32> to vector<4x256xf32>
    %68 = arith.mulf %67, %65 : vector<4x256xf32>
    %c0_15 = arith.constant 0 : index
    %c0_16 = arith.constant 0 : index
    %c0_17 = arith.constant 0 : index
    %69 = vector.load %arg8[%c0_15, %c0_16, %c0_17] : memref<1x4x256xf32, #tpu.memory_space<vmem>>, vector<1x4x256xf32>
    %70 = vector.shape_cast %69 : vector<1x4x256xf32> to vector<4x256xf32>
    %71 = vector.shape_cast %68 : vector<4x256xf32> to vector<1x4x256xf32>
    tpu.vector_store %arg8[%c0_15, %c0_16, %c0_17], %71 {strides = array<i32>} : memref<1x4x256xf32, #tpu.memory_space<vmem>>, vector<1x4x256xf32>,
    return
  }
  func.func @transform_0(%arg0: i32, %arg1: i32) -> (i32, i32, i32) {
    %c0_i32 = arith.constant 0 : i32
    %c0_i32_0 = arith.constant 0 : i32
    return %arg0, %c0_i32, %arg1 : i32, i32, i32
  }
  func.func @transform_1(%arg0: i32, %arg1: i32) -> (i32, i32, i32) {
    %c0_i32 = arith.constant 0 : i32
    %c0_i32_0 = arith.constant 0 : i32
    return %arg0, %c0_i32, %arg1 : i32, i32, i32
  }
  func.func @transform_2(%arg0: i32, %arg1: i32) -> (i32, i32) {
    %c0_i32 = arith.constant 0 : i32
    %c0_i32_0 = arith.constant 0 : i32
    %c0_i32_1 = arith.constant 0 : i32
    return %c0_i32, %c0_i32_0 : i32, i32
  }
  func.func @transform_3(%arg0: i32, %arg1: i32) -> (i32, i32) {
    %c0_i32 = arith.constant 0 : i32
    %c0_i32_0 = arith.constant 0 : i32
    %c0_i32_1 = arith.constant 0 : i32
    return %c0_i32, %c0_i32_0 : i32, i32
  }
  func.func @transform_4(%arg0: i32, %arg1: i32) -> (i32, i32) {
    %c0_i32 = arith.constant 0 : i32
    %c0_i32_0 = arith.constant 0 : i32
    %c0_i32_1 = arith.constant 0 : i32
    return %c0_i32, %c0_i32_0 : i32, i32
  }
  func.func @transform_5(%arg0: i32, %arg1: i32) -> (i32, i32) {
    %c0_i32 = arith.constant 0 : i32
    %c0_i32_0 = arith.constant 0 : i32
    %c0_i32_1 = arith.constant 0 : i32
    return %c0_i32, %c0_i32_0 : i32, i32
  }
  func.func @transform_6(%arg0: i32, %arg1: i32) -> (i32, i32, i32) {
    %c0_i32 = arith.constant 0 : i32
    %c0_i32_0 = arith.constant 0 : i32
    return %arg0, %c0_i32, %arg1 : i32, i32, i32
  }
}

</mosaic_0001>

<llo_original>
// kernel: tpu_custom_call.1
$region0: #{tpu_custom_call.1}
  #allocation0 [shape = 'u32[]', space=smem, size = 0x4, offset = 0x4, fixed_abs, tag = 'smem constant byte address 0x4 - core index']
  #allocation1 [shape = 'u32[72,128]{1,0:T(1,128)}', space=vmem, size = 0x9000, scoped, tag = 'internal scratch']
  %s0 = inlined_call_operand.hbm [shape: f32[2,4,256], index: 0, kind: input, shape index: {}]
  %s1 = inlined_call_operand.hbm [shape: f32[2,4,256], index: 1, kind: input, shape index: {}]
  %s2 = inlined_call_operand.vmem [shape: f32[4,4], index: 2, kind: input, shape index: {}]
  %s3 = inlined_call_operand.vmem [shape: f32[4,1], index: 3, kind: input, shape index: {}]
  %s4 = inlined_call_operand.vmem [shape: f32[4,4], index: 4, kind: input, shape index: {}]
  %s5 = inlined_call_operand.vmem [shape: f32[4,1], index: 5, kind: input, shape index: {}]
  %s6 = inlined_call_operand.hbm [shape: f32[2,4,256], index: 6, kind: output, shape index: {}]
  %s7 = sld [smem:[#allocation0]]
  $region65: #{tpu_custom_call.1} parent=0
    _
  %s9 = ssub.s32 1, %s7
  %s10 = scalar_select 0, %s9, %s7
  $region1: #{tpu_custom_call.1} parent=0
    #allocation2 [shape = 'u8[8192]{0}', space=vmem, size = 0x2000, scoped, tag = 'input window, operand 0']
    #allocation3 [shape = 's32[2]{0}', space=sflag, size = 0x8, scoped, tag = 'scoped memory for tpu_custom_call.1']
    #allocation4 [shape = 's32[2]{0}', space=sflag, size = 0x8, scoped, tag = 'scoped memory for tpu_custom_call.1']
    #allocation5 [shape = 'u8[8192]{0}', space=vmem, size = 0x2000, scoped, tag = 'input window, operand 1']
    #allocation6 [shape = 's32[2]{0}', space=sflag, size = 0x8, scoped, tag = 'scoped memory for tpu_custom_call.1']
    #allocation7 [shape = 'u8[8192]{0}', space=vmem, size = 0x2000, scoped, tag = 'output window, operand 0']
    %11 = vsyncpa [#allocation3], 0
    %s12 = scalar_lea.sflag [#allocation3], 1
    %13 = vsyncpa %s12, 0
    %14 = vsyncpa [#allocation6], 0
    %s15 = scalar_lea.sflag [#allocation6], 1
    %16 = vsyncpa %s15, 0
    %17 = vsyncpa [#allocation4], 0
    %s18 = scalar_lea.sflag [#allocation4], 1
    %19 = vsyncpa %s18, 0
    loop: start=0, step=1, limit=4
    $region2: #{tpu_custom_call.1} parent=1 // loop_pre_header
      _
    $region3: #{tpu_custom_call.1} parent=1 // loop_header
      %s21 = sphi 0, %s25
      %p22 = scmp.ge.s32.totalorder %s21, 4
      %s28 = sphi 0, %s40
      %s29 = sphi 0, %s36
      %s30 = sphi 0, %s28
      %s31 = sphi 0, %s29
      %s32 = sphi 0, %s30
      %s33 = sphi 0, %s31
      %s45 = sphi 0, %s47
      %s48 = sphi 0, %s45
      %s49 = sphi 0, %s48
      %s65 = sphi 0, %s49
      %s73 = sphi 0, %s75
      %s76 = sphi 0, %s73
      %s77 = sphi 0, %s76
      %s93 = sphi 0, %s77
      %s97 = sphi 0, %s97
      %s99 = sphi 0, %s97
      %s100 = sphi 0, %s99
      %s114 = sphi 0, %s100
      %s118 = sphi 0, %s118
      %s120 = sphi 0, %s118
      %s121 = sphi 0, %s120
      %s135 = sphi 0, %s121
      %s139 = sphi 0, %s139
      %s141 = sphi 0, %s139
      %s142 = sphi 0, %s141
      %s156 = sphi 0, %s142
      %s160 = sphi 0, %s160
      %s162 = sphi 0, %s160
      %s163 = sphi 0, %s162
      %s177 = sphi 0, %s163
      %s185 = sphi 0, %s187
      %s188 = sphi 0, %s185
      %s189 = sphi 0, %s188
      %s205 = sphi 0, %s189
    $region4: #{tpu_custom_call.1} parent=1 // loop_header_branch
      %24 = sbr.rel (%p22) target = $region8
    $region5: #{tpu_custom_call.1} parent=1 // loop_body
      %s26 = ssub.s32 %s21, 1
      %s27 = ssub.s32 %s21, 2
      %s34 = sadd.s32 1, %s29
      %p35 = scmp.ge.s32.totalorder %s34, 1
      %s36 = scalar_select %p35, 0, %s34
      %s37 = sadd.s32 1, %s28
      %s38 = scalar_select %p35, %s37, %s28
      %p39 = scmp.ge.s32.totalorder %s38, 2
      %s40 = scalar_select %p39, 0, %s38
      %s41 = ssub.s32 %s28, %s40
      %s42 = ssub.s32 %s29, %s36
      %s43 = sor.u32 %s41, %s42
      %p44 = scmp.eq.s32.totalorder %s43, 0
      %s46 = sadd.s32 %s45, 1
      %s47 = scalar_select %p44, %s45, %s46
      %p50 = pneg %p44
      %p51 = scmp.eq.s32.totalorder %s21, 1
      %p52 = por %p50, %p51
      %p53 = scmp.ne.s32.totalorder %s45, %s48
      %p54 = scmp.eq.s32.totalorder %s21, 0
      %p55 = por %p53, %p54
      %p56 = scmp.ne.s32.totalorder %s45, %s48
      %p57 = scmp.eq.s32.totalorder %s26, 1
      %p58 = por %p56, %p57
      %p59 = scmp.ne.s32.totalorder %s48, %s49
      %p60 = scmp.eq.s32.totalorder %s26, 0
      %p61 = por %p59, %p60
      %p62 = scmp.ne.s32.totalorder %s48, %s49
      %p63 = scmp.eq.s32.totalorder %s27, 1
      %p64 = por %p62, %p63
      %p66 = scmp.ne.s32.totalorder %s49, %s65
      %p67 = scmp.eq.s32.totalorder %s27, 0
      %p68 = por %p66, %p67
      %s69 = ssub.s32 %s28, %s40
      %s70 = ssub.s32 %s29, %s36
      %s71 = sor.u32 %s69, %s70
      %p72 = scmp.eq.s32.totalorder %s71, 0
      %s74 = sadd.s32 %s73, 1
      %s75 = scalar_select %p72, %s73, %s74
      %p78 = pneg %p72
      %p79 = scmp.eq.s32.totalorder %s21, 1
      %p80 = por %p78, %p79
      %p81 = scmp.ne.s32.totalorder %s73, %s76
      %p82 = scmp.eq.s32.totalorder %s21, 0
      %p83 = por %p81, %p82
      %p84 = scmp.ne.s32.totalorder %s73, %s76
      %p85 = scmp.eq.s32.totalorder %s26, 1
      %p86 = por %p84, %p85
      %p87 = scmp.ne.s32.totalorder %s76, %s77
      %p88 = scmp.eq.s32.totalorder %s26, 0
      %p89 = por %p87, %p88
      %p90 = scmp.ne.s32.totalorder %s76, %s77
      %p91 = scmp.eq.s32.totalorder %s27, 1
      %p92 = por %p90, %p91
      %p94 = scmp.ne.s32.totalorder %s77, %s93
      %p95 = scmp.eq.s32.totalorder %s27, 0
      %p96 = por %p94, %p95
      %s98 = sadd.s32 %s97, 1
      %p101 = scmp.eq.s32.totalorder %s21, 1
      %p102 = scmp.ne.s32.totalorder %s97, %s99
      %p103 = scmp.eq.s32.totalorder %s21, 0
      %p104 = por %p102, %p103
      %p105 = scmp.ne.s32.totalorder %s97, %s99
      %p106 = scmp.eq.s32.totalorder %s26, 1
      %p107 = por %p105, %p106
      %p108 = scmp.ne.s32.totalorder %s99, %s100
      %p109 = scmp.eq.s32.totalorder %s26, 0
      %p110 = por %p108, %p109
      %p111 = scmp.ne.s32.totalorder %s99, %s100
      %p112 = scmp.eq.s32.totalorder %s27, 1
      %p113 = por %p111, %p112
      %p115 = scmp.ne.s32.totalorder %s100, %s114
      %p116 = scmp.eq.s32.totalorder %s27, 0
      %p117 = por %p115, %p116
      %s119 = sadd.s32 %s118, 1
      %p122 = scmp.eq.s32.totalorder %s21, 1
      %p123 = scmp.ne.s32.totalorder %s118, %s120
      %p124 = scmp.eq.s32.totalorder %s21, 0
      %p125 = por %p123, %p124
      %p126 = scmp.ne.s32.totalorder %s118, %s120
      %p127 = scmp.eq.s32.totalorder %s26, 1
      %p128 = por %p126, %p127
      %p129 = scmp.ne.s32.totalorder %s120, %s121
      %p130 = scmp.eq.s32.totalorder %s26, 0
      %p131 = por %p129, %p130
      %p132 = scmp.ne.s32.totalorder %s120, %s121
      %p133 = scmp.eq.s32.totalorder %s27, 1
      %p134 = por %p132, %p133
      %p136 = scmp.ne.s32.totalorder %s121, %s135
      %p137 = scmp.eq.s32.totalorder %s27, 0
      %p138 = por %p136, %p137
      %s140 = sadd.s32 %s139, 1
      %p143 = scmp.eq.s32.totalorder %s21, 1
      %p144 = scmp.ne.s32.totalorder %s139, %s141
      %p145 = scmp.eq.s32.totalorder %s21, 0
      %p146 = por %p144, %p145
      %p147 = scmp.ne.s32.totalorder %s139, %s141
      %p148 = scmp.eq.s32.totalorder %s26, 1
      %p149 = por %p147, %p148
      %p150 = scmp.ne.s32.totalorder %s141, %s142
      %p151 = scmp.eq.s32.totalorder %s26, 0
      %p152 = por %p150, %p151
      %p153 = scmp.ne.s32.totalorder %s141, %s142
      %p154 = scmp.eq.s32.totalorder %s27, 1
      %p155 = por %p153, %p154
      %p157 = scmp.ne.s32.totalorder %s142, %s156
      %p158 = scmp.eq.s32.totalorder %s27, 0
      %p159 = por %p157, %p158
      %s161 = sadd.s32 %s160, 1
      %p164 = scmp.eq.s32.totalorder %s21, 1
      %p165 = scmp.ne.s32.totalorder %s160, %s162
      %p166 = scmp.eq.s32.totalorder %s21, 0
      %p167 = por %p165, %p166
      %p168 = scmp.ne.s32.totalorder %s160, %s162
      %p169 = scmp.eq.s32.totalorder %s26, 1
      %p170 = por %p168, %p169
      %p171 = scmp.ne.s32.totalorder %s162, %s163
      %p172 = scmp.eq.s32.totalorder %s26, 0
      %p173 = por %p171, %p172
      %p174 = scmp.ne.s32.totalorder %s162, %s163
      %p175 = scmp.eq.s32.totalorder %s27, 1
      %p176 = por %p174, %p175
      %p178 = scmp.ne.s32.totalorder %s163, %s177
      %p179 = scmp.eq.s32.totalorder %s27, 0
      %p180 = por %p178, %p179
      %s181 = ssub.s32 %s28, %s40
      %s182 = ssub.s32 %s29, %s36
      %s183 = sor.u32 %s181, %s182
      %p184 = scmp.eq.s32.totalorder %s183, 0
      %s186 = sadd.s32 %s185, 1
      %s187 = scalar_select %p184, %s185, %s186
      %p190 = pneg %p184
      %p191 = scmp.eq.s32.totalorder %s21, 1
      %p192 = por %p190, %p191
      %p193 = scmp.ne.s32.totalorder %s185, %s188
      %p194 = scmp.eq.s32.totalorder %s21, 0
      %p195 = por %p193, %p194
      %p196 = scmp.ne.s32.totalorder %s185, %s188
      %p197 = scmp.eq.s32.totalorder %s26, 1
      %p198 = por %p196, %p197
      %p199 = scmp.ne.s32.totalorder %s188, %s189
      %p200 = scmp.eq.s32.totalorder %s26, 0
      %p201 = por %p199, %p200
      %p202 = scmp.ne.s32.totalorder %s188, %s189
      %p203 = scmp.eq.s32.totalorder %s27, 1
      %p204 = por %p202, %p203
      %p206 = scmp.ne.s32.totalorder %s189, %s205
      %p207 = scmp.eq.s32.totalorder %s27, 0
      %p208 = por %p206, %p207
      %p209 = scmp.le.s32.totalorder 1, %s21
      %p210 = scmp.lt.s32.totalorder %s21, 3
      %p211 = pnand %p209, %p210
      %p212 = pneg %p211
      // Predicated region
      $region9: #{tpu_custom_call.1} parent=5 // pred_check
        _
      $region10: #{tpu_custom_call.1} parent=5 // pred_check_branch
        %214 = sbr.rel (%p211) target = $region12
      $region11: #{tpu_custom_call.1} parent=5 // pred_region
        %s215 = ssub.s32 %s21, 1
        // Predicated region
        $region13: #{tpu_custom_call.1} parent=11 // pred_check
          %p216 = pneg %p110
        $region14: #{tpu_custom_call.1} parent=11 // pred_check_branch
          %218 = sbr.rel (%p216) target = $region16
        $region15: #{tpu_custom_call.1} parent=11 // pred_region
          _
        $region16: #{tpu_custom_call.1} parent=11 // pred_fallthru
          _
        // Predicated region
        $region17: #{tpu_custom_call.1} parent=11 // pred_check
          %p219 = pneg %p131
        $region18: #{tpu_custom_call.1} parent=11 // pred_check_branch
          %221 = sbr.rel (%p219) target = $region20
        $region19: #{tpu_custom_call.1} parent=11 // pred_region
          _
        $region20: #{tpu_custom_call.1} parent=11 // pred_fallthru
          _
        // Predicated region
        $region21: #{tpu_custom_call.1} parent=11 // pred_check
          %p222 = pneg %p152
        $region22: #{tpu_custom_call.1} parent=11 // pred_check_branch
          %224 = sbr.rel (%p222) target = $region24
        $region23: #{tpu_custom_call.1} parent=11 // pred_region
          _
        $region24: #{tpu_custom_call.1} parent=11 // pred_fallthru
          _
        // Predicated region
        $region25: #{tpu_custom_call.1} parent=11 // pred_check
          %p225 = pneg %p173
        $region26: #{tpu_custom_call.1} parent=11 // pred_check_branch
          %227 = sbr.rel (%p225) target = $region28
        $region27: #{tpu_custom_call.1} parent=11 // pred_region
          _
        $region28: #{tpu_custom_call.1} parent=11 // pred_fallthru
          _
      $region12: #{tpu_custom_call.1} parent=5 // pred_fallthru
        _
      %p228 = scmp.lt.s32.totalorder %s21, 2
      // Predicated region
      $region29: #{tpu_custom_call.1} parent=5 // pred_check
        %p229 = pneg %p228
      $region30: #{tpu_custom_call.1} parent=5 // pred_check_branch
        %231 = sbr.rel (%p229) target = $region32
      $region31: #{tpu_custom_call.1} parent=5 // pred_region
        // Predicated region
        $region33: #{tpu_custom_call.1} parent=31 // pred_check
          %p232 = pneg %p55
        $region34: #{tpu_custom_call.1} parent=31 // pred_check_branch
          %234 = sbr.rel (%p232) target = $region36
        $region35: #{tpu_custom_call.1} parent=31 // pred_region
          %s235 = sand.u32 %s45, 1
          %s236 = scalar_lea.sflag [#allocation3], %s235
          %s237 = sand.u32 %s45, 1
          %s238 = smul.addr %s237, 8
          %s239 = scalar_lea.vmem [#allocation2], %s238
          %s240 = smul.u32 2, %s29
          %242 = vsyncadd %s236, 0
          %s243 = smul.addr %s28, 2
          %s244 = sadd.s32 %s240, %s243
          %s245 = smul.addr %s244, 4
          %s246 = scalar_lea.hbm %s0, %s245
          %s248 = sshll.u32 %s246, 4
          %s249 = int_to_ptr.hbm [resolvable:$true] %s248
          %s250 = sshll.u32 %s239, 4
          %s251 = int_to_ptr.vmem [resolvable:$true] %s250
          %253 = dma.hbm_to_vmem [thread:$0]  %s249, 128, %s251, %s236
        $region36: #{tpu_custom_call.1} parent=31 // pred_fallthru
          _
        // Predicated region
        $region37: #{tpu_custom_call.1} parent=31 // pred_check
          %p254 = pneg %p83
        $region38: #{tpu_custom_call.1} parent=31 // pred_check_branch
          %256 = sbr.rel (%p254) target = $region40
        $region39: #{tpu_custom_call.1} parent=31 // pred_region
          %s257 = sand.u32 %s73, 1
          %s258 = scalar_lea.sflag [#allocation6], %s257
          %s259 = sand.u32 %s73, 1
          %s260 = smul.addr %s259, 8
          %s261 = scalar_lea.vmem [#allocation5], %s260
          %s262 = smul.u32 2, %s29
          %264 = vsyncadd %s258, 0
          %s265 = smul.addr %s28, 2
          %s266 = sadd.s32 %s262, %s265
          %s267 = smul.addr %s266, 4
          %s268 = scalar_lea.hbm %s1, %s267
          %s270 = sshll.u32 %s268, 4
          %s271 = int_to_ptr.hbm [resolvable:$true] %s270
          %s272 = sshll.u32 %s261, 4
          %s273 = int_to_ptr.vmem [resolvable:$true] %s272
          %275 = dma.hbm_to_vmem [thread:$0]  %s271, 128, %s273, %s258
        $region40: #{tpu_custom_call.1} parent=31 // pred_fallthru
          _
      $region32: #{tpu_custom_call.1} parent=5 // pred_fallthru
        _
      %p276 = scmp.le.s32.totalorder 1, %s21
      %p277 = scmp.lt.s32.totalorder %s21, 3
      %p278 = pnand %p276, %p277
      %p279 = pneg %p278
      // Predicated region
      $region41: #{tpu_custom_call.1} parent=5 // pred_check
        _
      $region42: #{tpu_custom_call.1} parent=5 // pred_check_branch
        %281 = sbr.rel (%p278) target = $region44
      $region43: #{tpu_custom_call.1} parent=5 // pred_region
        %s282 = ssub.s32 %s21, 1
        %s283 = sand.u32 %s48, 1
        %s284 = scalar_lea.sflag [#allocation3], %s283
        %s285 = sand.u32 %s48, 1
        %s286 = smul.addr %s285, 8
        %s287 = scalar_lea.vmem [#allocation2], %s286
        // Predicated region
        $region45: #{tpu_custom_call.1} parent=43 // pred_check
          %p288 = pneg %p61
        $region46: #{tpu_custom_call.1} parent=43 // pred_check_branch
          %290 = sbr.rel (%p288) target = $region48
        $region47: #{tpu_custom_call.1} parent=43 // pred_region
          %292 = dma.done %s284, 128
        $region48: #{tpu_custom_call.1} parent=43 // pred_fallthru
          _
        %s293 = sand.u32 %s76, 1
        %s294 = scalar_lea.sflag [#allocation6], %s293
        %s295 = sand.u32 %s76, 1
        %s296 = smul.addr %s295, 8
        %s297 = scalar_lea.vmem [#allocation5], %s296
        // Predicated region
        $region49: #{tpu_custom_call.1} parent=43 // pred_check
          %p298 = pneg %p89
        $region50: #{tpu_custom_call.1} parent=43 // pred_check_branch
          %300 = sbr.rel (%p298) target = $region52
        $region51: #{tpu_custom_call.1} parent=43 // pred_region
          %302 = dma.done %s294, 128
        $region52: #{tpu_custom_call.1} parent=43 // pred_fallthru
          _
        %s303 = sand.u32 %s48, 1
        %s304 = scalar_lea.sflag [#allocation3], %s303
        %s305 = sand.u32 %s48, 1
        %s306 = smul.addr %s305, 8
        %s307 = scalar_lea.vmem [#allocation2], %s306
        %p308 = pneg %p61
        %p309 = pneg %p58
        %s310 = sand.u32 %s76, 1
        %s311 = scalar_lea.sflag [#allocation6], %s310
        %s312 = sand.u32 %s76, 1
        %s313 = smul.addr %s312, 8
        %s314 = scalar_lea.vmem [#allocation5], %s313
        %p315 = pneg %p89
        %p316 = pneg %p86
        %p317 = pneg %p110
        %p318 = pneg %p107
        %p319 = pneg %p131
        %p320 = pneg %p128
        %p321 = pneg %p152
        %p322 = pneg %p149
        %p323 = pneg %p173
        %p324 = pneg %p170
        %p325 = pneg %p201
        %p326 = pneg %p198
        %s327 = sand.u32 %s188, 1
        %s328 = scalar_lea.sflag [#allocation4], %s327
        %s329 = sand.u32 %s188, 1
        %s330 = smul.addr %s329, 8
        %s331 = scalar_lea.vmem [#allocation7], %s330
        %s332 = smul.u32 2, %s31
        %s333 = smul.u32 2, %s31
        %s334 = smul.u32 2, %s31
        %v335 = vld [vmem:[%s297] sm:$0xff]
        %v336 = vld [vmem:[%s2] sm:$0xf]
        %v337 = vld [vmem:[%s3] sm:$0xf]
        %v338 = vld [vmem:[%s4] sm:$0xf]
        %v339 = vld [vmem:[%s5] sm:$0xf]
        %341 = vset.pattern.permute.xlu0 0
        %342 = vperm.xlu0 %341, %v337
        %v343 = vpop.permute.xlu0 %342
        %346 = vset.pattern.permute.xlu0 0
        %347 = vperm.xlu0 %346, %v336
        %v348 = vpop.permute.xlu0 %347
        %v351 = vperm.slane %v335, 0
        %v352 = vperm.slane %v335, 4
        %v355 = vperm.slane %v351, 0
        %v356 = vperm.slane %v352, 0
        %v357 = vmul.f32 %v348, %v355
        %v358 = vmul.f32 %v348, %v356
        %v359 = vadd.f32 %v343, %v357
        %v360 = vadd.f32 %v343, %v358
        %361 = vset.pattern.permute.xlu0 1
        %362 = vperm.xlu0 %361, %v336
        %v363 = vpop.permute.xlu0 %362
        %v365 = vperm.slane %v335, 1
        %v366 = vperm.slane %v335, 5
        %v369 = vperm.slane %v365, 1
        %v370 = vperm.slane %v366, 1
        %v371 = vmul.f32 %v363, %v369
        %v372 = vmul.f32 %v363, %v370
        %v373 = vadd.f32 %v359, %v371
        %v374 = vadd.f32 %v360, %v372
        %375 = vset.pattern.permute.xlu0 2
        %376 = vperm.xlu0 %375, %v336
        %v377 = vpop.permute.xlu0 %376
        %v379 = vperm.slane %v335, 2
        %v380 = vperm.slane %v335, 6
        %v383 = vperm.slane %v379, 2
        %v384 = vperm.slane %v380, 2
        %v385 = vmul.f32 %v377, %v383
        %v386 = vmul.f32 %v377, %v384
        %v387 = vadd.f32 %v373, %v385
        %v388 = vadd.f32 %v374, %v386
        %389 = vset.pattern.permute.xlu0 3
        %390 = vperm.xlu0 %389, %v336
        %v391 = vpop.permute.xlu0 %390
        %v393 = vperm.slane %v335, 3
        %v394 = vperm.slane %v335, 7
        %v397 = vperm.slane %v393, 3
        %v398 = vperm.slane %v394, 3
        %v399 = vmul.f32 %v391, %v397
        %v400 = vmul.f32 %v391, %v398
        %v401 = vadd.f32 %v387, %v399
        %v402 = vadd.f32 %v388, %v400
        %v403 = vmax.f32 %v401, 0.0
        %v404 = vmax.f32 %v402, 0.0
        %406 = vset.pattern.permute.xlu0 0
        %407 = vperm.xlu0 %406, %v339
        %v408 = vpop.permute.xlu0 %407
        %411 = vset.pattern.permute.xlu0 0
        %412 = vperm.xlu0 %411, %v338
        %v413 = vpop.permute.xlu0 %412
        %v415 = vperm.slane %v403, 0
        %v416 = vperm.slane %v404, 0
        %v417 = vmul.f32 %v413, %v415
        %v418 = vmul.f32 %v413, %v416
        %v419 = vadd.f32 %v408, %v417
        %v420 = vadd.f32 %v408, %v418
        %421 = vset.pattern.permute.xlu0 1
        %422 = vperm.xlu0 %421, %v338
        %v423 = vpop.permute.xlu0 %422
        %v425 = vperm.slane %v403, 1
        %v426 = vperm.slane %v404, 1
        %v427 = vmul.f32 %v423, %v425
        %v428 = vmul.f32 %v423, %v426
        %v429 = vadd.f32 %v419, %v427
        %v430 = vadd.f32 %v420, %v428
        %431 = vset.pattern.permute.xlu0 2
        %432 = vperm.xlu0 %431, %v338
        %v433 = vpop.permute.xlu0 %432
        %v435 = vperm.slane %v403, 2
        %v436 = vperm.slane %v404, 2
        %v437 = vmul.f32 %v433, %v435
        %v438 = vmul.f32 %v433, %v436
        %v439 = vadd.f32 %v429, %v437
        %v440 = vadd.f32 %v430, %v438
        %441 = vset.pattern.permute.xlu0 3
        %442 = vperm.xlu0 %441, %v338
        %v443 = vpop.permute.xlu0 %442
        %v445 = vperm.slane %v403, 3
        %v446 = vperm.slane %v404, 3
        %v447 = vmul.f32 %v443, %v445
        %v448 = vmul.f32 %v443, %v446
        %v449 = vadd.f32 %v439, %v447
        %v450 = vadd.f32 %v440, %v448
        %v451 = vsub.f32 0.0, %v449
        %v452 = vsub.f32 0.0, %v450
        %v453 = vmul.f32 %v451, 1.442695
        %v454 = vpow.pop %v453
        %v455 = vmul.f32 %v452, 1.442695
        %v456 = vpow.pop %v455
        %v457 = vadd.f32 %v454, 1.0
        %v458 = vadd.f32 %v456, 1.0
        %v459 = vrcp.pop %v457
        %v460 = vrcp.pop %v458
        %v461 = vld [vmem:[%s287] sm:$0xff]
        %v464 = vrot.slane %v460, 4
        %vm465 = vcmask 1043456
        %v466 = vsel %vm465, %v459, %v464
        %v468 = vmul.f32 %v461, %v466
        %469 = vst [vmem:[%s331] sm:$0xff] %v468
        %s470 = sand.u32 %s188, 1
        %s471 = scalar_lea.sflag [#allocation4], %s470
        %s472 = sand.u32 %s188, 1
        %s473 = smul.addr %s472, 8
        %s474 = scalar_lea.vmem [#allocation7], %s473
        // Predicated region
        $region53: #{tpu_custom_call.1} parent=43 // pred_check
          %p475 = pneg %p198
        $region54: #{tpu_custom_call.1} parent=43 // pred_check_branch
          %477 = sbr.rel (%p475) target = $region56
        $region55: #{tpu_custom_call.1} parent=43 // pred_region
          %s478 = smul.u32 2, %s31
          %480 = vsyncadd %s471, 0
          %s481 = smul.addr %s30, 2
          %s482 = sadd.s32 %s478, %s481
          %s483 = smul.addr %s482, 4
          %s484 = scalar_lea.hbm %s6, %s483
          %s486 = sshll.u32 %s474, 4
          %s487 = int_to_ptr.vmem [resolvable:$true] %s486
          %s488 = sshll.u32 %s484, 4
          %s489 = int_to_ptr.hbm [resolvable:$true] %s488
          %491 = dma.vmem_to_hbm [thread:$0]  %s487, 128, %s489, %s471
        $region56: #{tpu_custom_call.1} parent=43 // pred_fallthru
          _
      $region44: #{tpu_custom_call.1} parent=5 // pred_fallthru
        _
      %p492 = scmp.le.s32.totalorder 2, %s21
      // Predicated region
      $region57: #{tpu_custom_call.1} parent=5 // pred_check
        %p493 = pneg %p492
      $region58: #{tpu_custom_call.1} parent=5 // pred_check_branch
        %495 = sbr.rel (%p493) target = $region60
      $region59: #{tpu_custom_call.1} parent=5 // pred_region
        %s496 = ssub.s32 %s21, 2
        // Predicated region
        $region61: #{tpu_custom_call.1} parent=59 // pred_check
          %p497 = pneg %p204
        $region62: #{tpu_custom_call.1} parent=59 // pred_check_branch
          %499 = sbr.rel (%p497) target = $region64
        $region63: #{tpu_custom_call.1} parent=59 // pred_region
          %s500 = sand.u32 %s189, 1
          %s501 = scalar_lea.sflag [#allocation4], %s500
          %s502 = sand.u32 %s189, 1
          %s503 = smul.addr %s502, 8
          %s504 = scalar_lea.vmem [#allocation7], %s503
          %506 = dma.done %s501, 128
        $region64: #{tpu_custom_call.1} parent=59 // pred_fallthru
          _
      $region60: #{tpu_custom_call.1} parent=5 // pred_fallthru
        _
    $region6: #{tpu_custom_call.1} parent=1 // loop_footer
      %s25 = sadd.s32 1, %s21
    $region7: #{tpu_custom_call.1} parent=1 // loop_footer_branch
      %20 = sbr.rel target = $region3
    $region8: #{tpu_custom_call.1} parent=1 // loop_exit
      _
    %507 = vsyncpa [#allocation3], 1
    %s508 = scalar_lea.sflag [#allocation3], 1
    %509 = vsyncpa %s508, 1
    %510 = vsyncpa [#allocation6], 1
    %s511 = scalar_lea.sflag [#allocation6], 1
    %512 = vsyncpa %s511, 1
    %513 = vsyncpa [#allocation4], 1
    %s514 = scalar_lea.sflag [#allocation4], 1
    %515 = vsyncpa %s514, 1

</llo_original>
